<compile_context>
chip_gen: v7x
topology: tpu7x:2x2x1
jax: 0.10.0
libtpu: 0.0.40
codegen_flags: <defaults>
</compile_context>

<pallas_src>
import math

import jax
import jax.numpy as jnp
from jax.experimental import pallas as pl
from jax.experimental.pallas import tpu as pltpu

_SMALL_BATCH = 64     # below this, use the single-block (grid-less) path
_TILE_B_MAX = 2048    # batch tile cap; ~1.1 MiB/step double-buffered, overhead-amortizing


def _round_up(x, m):
    return ((x + m - 1) // m) * m


def _actor_kernel(x_ref, w1_ref, b1_ref, w2_ref, b2_ref, w3_ref, b3_ref, o_ref):
    """Fused MLP + softmax on one batch tile. Everything stays f32."""
    x = x_ref[...]

    h1 = jnp.dot(x, w1_ref[...], preferred_element_type=jnp.float32)
    h1 = jnp.maximum(h1 + b1_ref[...], 0.0)

    h2 = jnp.dot(h1, w2_ref[...], preferred_element_type=jnp.float32)
    h2 = jnp.maximum(h2 + b2_ref[...], 0.0)

    logits = jnp.dot(h2, w3_ref[...], preferred_element_type=jnp.float32)
    logits = logits + b3_ref[...]

    # numerically-stable softmax over the action axis
    logits = logits - jnp.max(logits, axis=-1, keepdims=True)
    e = jnp.exp(logits)
    denom = jnp.sum(e, axis=-1, keepdims=True)
    # EUP vrcp (idle slot) + one Newton refinement => ~1e-7 relative error
    r = pl.reciprocal(denom, approx=True)
    r = r * (2.0 - denom * r)
    o_ref[...] = (e * r).astype(o_ref.dtype)


def actor_network_forward(state, params):
    """Forward pass of ActorNetwork.

    state: (state_size,) or (B, state_size)
    params: dict with w1,b1,w2,b2,w3,b3; weights stored (in_features, out_features),
            biases stored (1, out_features), all float32 (kernel dtypes, cast once
            at init -- no per-call casts).
    Returns action probabilities with the same leading shape as `state`.
    """
    squeeze = state.ndim == 1
    if squeeze:
        state = state[None, :]
    if state.dtype != jnp.float32:
        state = state.astype(jnp.float32)

    B, S = state.shape
    A = params["w3"].shape[1]
    w1, b1 = params["w1"], params["b1"]
    w2, b2 = params["w2"], params["b2"]
    w3, b3 = params["w3"], params["b3"]
    args = (state, w1, b1, w2, b2, w3, b3)

    if B <= _SMALL_BATCH:
        # Tiny batch: single un-tiled block; block shape == array shape is legal
        # even when B is not a multiple of 8. Pure launch-overhead regime.
        full = lambda a: pl.BlockSpec(a.shape, lambda: (0,) * a.ndim)
        out = pl.pallas_call(
            _actor_kernel,
            out_shape=jax.ShapeDtypeStruct((B, A), jnp.float32),
            in_specs=[full(a) for a in args],
            out_specs=pl.BlockSpec((B, A), lambda: (0, 0)),
        )(*args)
    else:
        # Large batch: 1-D batch grid, big tiles, compact (tile_b, A) output.
        # Keep >= 2 grid steps so v7x megacore can shard the "parallel" axis;
        # on v5e/v6e (1 TC) the two steps just pipeline.
        tile_b = min(_TILE_B_MAX, _round_up(pl.cdiv(B, 2), 8))
        grid = (pl.cdiv(B, tile_b),)   # ragged last tile handled by Pallas padding
        resident = lambda a: pl.BlockSpec(a.shape, lambda i: (0,) * a.ndim)

        out = pl.pallas_call(
            _actor_kernel,
            out_shape=jax.ShapeDtypeStruct((B, A), jnp.float32),
            grid=grid,
            in_specs=[pl.BlockSpec((tile_b, S), lambda i: (i, 0)),
                      resident(w1), resident(b1),
                      resident(w2), resident(b2),
                      resident(w3), resident(b3)],
            out_specs=pl.BlockSpec((tile_b, A), lambda i: (i, 0)),
            compiler_params=pltpu.CompilerParams(
                dimension_semantics=("parallel",)),
        )(*args)

    if squeeze:
        out = out[0]
    return out


def init_actor_params(key, state_size, action_size):
    """PyTorch nn.Linear-style init (uniform +/- 1/sqrt(fan_in)).

    Weights stored already transposed to (in_features, out_features); biases (1, out).
    Stored directly in the kernel dtypes (f32) so the forward never casts.
    """
    dims = [(state_size, 64), (64, 64), (64, action_size)]
    params = {}
    for idx, (fan_in, fan_out) in enumerate(dims, start=1):
        key, kw, kb = jax.random.split(key, 3)
        bound = 1.0 / math.sqrt(fan_in)
        params[f"w{idx}"] = jax.random.uniform(
            kw, (fan_in, fan_out), jnp.float32, minval=-bound, maxval=bound)
        params[f"b{idx}"] = jax.random.uniform(
            kb, (1, fan_out), jnp.float32, minval=-bound, maxval=bound)
    return params


def _reference_forward(state, params):
    x = state if state.ndim == 2 else state[None, :]
    h1 = jnp.maximum(x @ params["w1"] + params["b1"], 0.0)
    h2 = jnp.maximum(h1 @ params["w2"] + params["b2"], 0.0)
    return jax.nn.softmax(h2 @ params["w3"] + params["b3"], axis=-1)


if __name__ == "__main__":
    state_size = 8
    action_size = 4

    key = jax.random.PRNGKey(0)
    key, k_small, k_large = jax.random.split(key, 3)
    params = init_actor_params(key, state_size, action_size)

    # --- tiny batch (single-block path) ---
    state_small = jax.random.uniform(k_small, (2, state_size), jnp.float32)
    probs_small = jax.block_until_ready(actor_network_forward(state_small, params))
    ref_small = _reference_forward(state_small, params)
    assert probs_small.shape == (2, action_size)
    assert bool(jnp.all(jnp.abs(jnp.sum(probs_small, axis=-1) - 1.0) < 1e-4))
    assert bool(jnp.max(jnp.abs(probs_small - ref_small)) < 2e-2)

    # --- single state vector, mirrors `state = torch.rand(8)` in the spec ---
    single = jax.block_until_ready(actor_network_forward(state_small[0], params))
    assert single.shape == (action_size,)
    assert bool(jnp.abs(jnp.sum(single) - 1.0) < 1e-4)

    # --- large batch: tiled/pipelined path, 2 grid steps, compact output ---
    state_large = jax.random.uniform(k_large, (512, state_size), jnp.float32)
    probs_large = jax.block_until_ready(actor_network_forward(state_large, params))
    ref_large = _reference_forward(state_large, params)
    assert probs_large.shape == (512, action_size)
    assert bool(jnp.all(jnp.abs(jnp.sum(probs_large, axis=-1) - 1.0) < 1e-4))
    assert bool(jnp.max(jnp.abs(probs_large - ref_large)) < 2e-2)

    # --- non-multiple batch exercises the ragged (boundary-padded) final tile ---
    probs_odd = jax.block_until_ready(
        actor_network_forward(state_large[:300], params))
    ref_odd = _reference_forward(state_large[:300], params)
    assert probs_odd.shape == (300, action_size)
    assert bool(jnp.all(jnp.abs(jnp.sum(probs_odd, axis=-1) - 1.0) < 1e-4))
    assert bool(jnp.max(jnp.abs(probs_odd - ref_odd)) < 2e-2)

    print("KERNEL_OK")
</pallas_src>

<mosaic_0001>
module attributes {stable_mosaic.version = 11 : i64} {
  func.func @_actor_kernel(%arg0: memref<2x8xf32, #tpu.memory_space<vmem>>, %arg1: memref<8x64xf32, #tpu.memory_space<vmem>>, %arg2: memref<1x64xf32, #tpu.memory_space<vmem>>, %arg3: memref<64x64xf32, #tpu.memory_space<vmem>>, %arg4: memref<1x64xf32, #tpu.memory_space<vmem>>, %arg5: memref<64x4xf32, #tpu.memory_space<vmem>>, %arg6: memref<1x4xf32, #tpu.memory_space<vmem>>, %arg7: memref<2x4xf32, #tpu.memory_space<vmem>>) attributes {dimension_semantics = [], scalar_prefetch = 0 : i64, scratch_operands = 0 : i64, tpu.core_type = #tpu.core_type<tc>} {
    %c0 = arith.constant 0 : index
    %c0_0 = arith.constant 0 : index
    %0 = vector.load %arg0[%c0, %c0_0] : memref<2x8xf32, #tpu.memory_space<vmem>>, vector<2x8xf32>
    %c0_1 = arith.constant 0 : index
    %c0_2 = arith.constant 0 : index
    %1 = vector.load %arg1[%c0_1, %c0_2] : memref<8x64xf32, #tpu.memory_space<vmem>>, vector<8x64xf32>
    %cst = arith.constant dense<0.000000e+00> : vector<2x64xf32>
    %2 = tpu.matmul %0, %1, %cst {dimension_numbers = #tpu.dot_dimension_numbers<[1], [0], [0], [1], [0, 0, 1, 1], [], []>} : vector<2x8xf32>, vector<8x64xf32>, vector<2x64xf32> -> vector<2x64xf32>
    %c0_3 = arith.constant 0 : index
    %c0_4 = arith.constant 0 : index
    %3 = vector.load %arg2[%c0_3, %c0_4] : memref<1x64xf32, #tpu.memory_space<vmem>>, vector<1x64xf32>
    %4 = vector.broadcast %3 : vector<1x64xf32> to vector<2x64xf32>
    %5 = arith.addf %2, %4 : vector<2x64xf32>
    %cst_5 = arith.constant 0.000000e+00 : f32
    %6 = vector.broadcast %cst_5 : f32 to vector<2x64xf32>
    %7 = arith.maximumf %5, %6 : vector<2x64xf32>
    %c0_6 = arith.constant 0 : index
    %c0_7 = arith.constant 0 : index
    %8 = vector.load %arg3[%c0_6, %c0_7] : memref<64x64xf32, #tpu.memory_space<vmem>>, vector<64x64xf32>
    %cst_8 = arith.constant dense<0.000000e+00> : vector<2x64xf32>
    %9 = tpu.matmul %7, %8, %cst_8 {dimension_numbers = #tpu.dot_dimension_numbers<[1], [0], [0], [1], [0, 0, 1, 1], [], []>} : vector<2x64xf32>, vector<64x64xf32>, vector<2x64xf32> -> vector<2x64xf32>
    %c0_9 = arith.constant 0 : index
    %c0_10 = arith.constant 0 : index
    %10 = vector.load %arg4[%c0_9, %c0_10] : memref<1x64xf32, #tpu.memory_space<vmem>>, vector<1x64xf32>
    %11 = vector.broadcast %10 : vector<1x64xf32> to vector<2x64xf32>
    %12 = arith.addf %9, %11 : vector<2x64xf32>
    %cst_11 = arith.constant 0.000000e+00 : f32
    %13 = vector.broadcast %cst_11 : f32 to vector<2x64xf32>
    %14 = arith.maximumf %12, %13 : vector<2x64xf32>
    %c0_12 = arith.constant 0 : index
    %c0_13 = arith.constant 0 : index
    %15 = vector.load %arg5[%c0_12, %c0_13] : memref<64x4xf32, #tpu.memory_space<vmem>>, vector<64x4xf32>
    %cst_14 = arith.constant dense<0.000000e+00> : vector<2x4xf32>
    %16 = tpu.matmul %14, %15, %cst_14 {dimension_numbers = #tpu.dot_dimension_numbers<[1], [0], [0], [1], [0, 0, 1, 1], [], []>} : vector<2x64xf32>, vector<64x4xf32>, vector<2x4xf32> -> vector<2x4xf32>
    %c0_15 = arith.constant 0 : index
    %c0_16 = arith.constant 0 : index
    %17 = vector.load %arg6[%c0_15, %c0_16] : memref<1x4xf32, #tpu.memory_space<vmem>>, vector<1x4xf32>
    %18 = vector.broadcast %17 : vector<1x4xf32> to vector<2x4xf32>
    %19 = arith.addf %16, %18 : vector<2x4xf32>
    %cst_17 = arith.constant dense<0xFF800000> : vector<2xf32>
    %20 = vector.multi_reduction <maximumf>, %19, %cst_17 [1] : vector<2x4xf32> to vector<2xf32>
    %21 = vector.shape_cast %20 : vector<2xf32> to vector<2x1xf32>
    %22 = vector.broadcast %21 : vector<2x1xf32> to vector<2x4xf32>
    %23 = arith.subf %19, %22 : vector<2x4xf32>
    %24 = math.exp %23 : vector<2x4xf32>
    %cst_18 = arith.constant dense<0.000000e+00> : vector<2xf32>
    %25 = vector.multi_reduction <add>, %24, %cst_18 [1] : vector<2x4xf32> to vector<2xf32>
    %26 = vector.shape_cast %25 : vector<2xf32> to vector<2x1xf32>
    %27 = tpu.reciprocal %26 {approx = true} : vector<2x1xf32> -> vector<2x1xf32>
    %28 = arith.mulf %26, %27 : vector<2x1xf32>
    %cst_19 = arith.constant 2.000000e+00 : f32
    %29 = vector.broadcast %cst_19 : f32 to vector<2x1xf32>
    %30 = arith.subf %29, %28 : vector<2x1xf32>
    %31 = arith.mulf %27, %30 : vector<2x1xf32>
    %32 = vector.broadcast %31 : vector<2x1xf32> to vector<2x4xf32>
    %33 = arith.mulf %24, %32 : vector<2x4xf32>
    %c0_20 = arith.constant 0 : index
    %c0_21 = arith.constant 0 : index
    %34 = vector.load %arg7[%c0_20, %c0_21] : memref<2x4xf32, #tpu.memory_space<vmem>>, vector<2x4xf32>
    tpu.vector_store %arg7[%c0_20, %c0_21], %33 {strides = array<i32>} : memref<2x4xf32, #tpu.memory_space<vmem>>, vector<2x4xf32>,
    return
  }
}

</mosaic_0001>

<llo_original>
// kernel: tpu_custom_call.1
$region0: #{tpu_custom_call.1}
  #allocation0 [shape = 'u32[]', space=smem, size = 0x4, offset = 0x4, fixed_abs, tag = 'smem constant byte address 0x4 - core index']
  #allocation1 [shape = 'u32[144,128]{1,0:T(1,128)}', space=vmem, size = 0x12000, scoped, tag = 'internal scratch']
  %s0 = inlined_call_operand.vmem [shape: f32[2,8], index: 0, kind: input, shape index: {}]
  %s1 = inlined_call_operand.vmem [shape: f32[8,64], index: 1, kind: input, shape index: {}]
  %s2 = inlined_call_operand.vmem [shape: f32[1,64], index: 2, kind: input, shape index: {}]
  %s3 = inlined_call_operand.vmem [shape: f32[64,64], index: 3, kind: input, shape index: {}]
  %s4 = inlined_call_operand.vmem [shape: f32[1,64], index: 4, kind: input, shape index: {}]
  %s5 = inlined_call_operand.vmem [shape: f32[64,4], index: 5, kind: input, shape index: {}]
  %s6 = inlined_call_operand.vmem [shape: f32[1,4], index: 6, kind: input, shape index: {}]
  %s7 = inlined_call_operand.hbm [shape: f32[2,4], index: 7, kind: output, shape index: {}]
  %s8 = sld [smem:[#allocation0]]
  $region38: #{tpu_custom_call.1} parent=0
    _
  %s10 = ssub.s32 1, %s8
  %s11 = scalar_select 0, %s10, %s8
  $region1: #{tpu_custom_call.1} parent=0
    #allocation2 [shape = 'u8[1024]{0}', space=vmem, size = 0x400, scoped, tag = 'output window, operand 0, single buffered']
    #allocation3 [shape = 's32[1]{0}', space=sflag, size = 0x4, scoped, tag = 'scoped memory for tpu_custom_call.1']
    %12 = vsyncpa [#allocation3], 0
    // Predicated region
    $region2: #{tpu_custom_call.1} parent=1 // pred_check
      _
    $region3: #{tpu_custom_call.1} parent=1 // pred_check_branch
      %14 = sbr.rel (0) target = $region5
    $region4: #{tpu_custom_call.1} parent=1 // pred_region
      _
    $region5: #{tpu_custom_call.1} parent=1 // pred_fallthru
      _
    // Predicated region
    $region6: #{tpu_custom_call.1} parent=1 // pred_check
      _
    $region7: #{tpu_custom_call.1} parent=1 // pred_check_branch
      %16 = sbr.rel (0) target = $region9
    $region8: #{tpu_custom_call.1} parent=1 // pred_region
      _
    $region9: #{tpu_custom_call.1} parent=1 // pred_fallthru
      _
    // Predicated region
    $region10: #{tpu_custom_call.1} parent=1 // pred_check
      _
    $region11: #{tpu_custom_call.1} parent=1 // pred_check_branch
      %18 = sbr.rel (0) target = $region13
    $region12: #{tpu_custom_call.1} parent=1 // pred_region
      _
    $region13: #{tpu_custom_call.1} parent=1 // pred_fallthru
      _
    // Predicated region
    $region14: #{tpu_custom_call.1} parent=1 // pred_check
      _
    $region15: #{tpu_custom_call.1} parent=1 // pred_check_branch
      %20 = sbr.rel (0) target = $region17
    $region16: #{tpu_custom_call.1} parent=1 // pred_region
      _
    $region17: #{tpu_custom_call.1} parent=1 // pred_fallthru
      _
    // Predicated region
    $region18: #{tpu_custom_call.1} parent=1 // pred_check
      _
    $region19: #{tpu_custom_call.1} parent=1 // pred_check_branch
      %22 = sbr.rel (0) target = $region21
    $region20: #{tpu_custom_call.1} parent=1 // pred_region
      _
    $region21: #{tpu_custom_call.1} parent=1 // pred_fallthru
      _
    // Predicated region
    $region22: #{tpu_custom_call.1} parent=1 // pred_check
      _
    $region23: #{tpu_custom_call.1} parent=1 // pred_check_branch
      %24 = sbr.rel (0) target = $region25
    $region24: #{tpu_custom_call.1} parent=1 // pred_region
      _
    $region25: #{tpu_custom_call.1} parent=1 // pred_fallthru
      _
    // Predicated region
    $region26: #{tpu_custom_call.1} parent=1 // pred_check
      _
    $region27: #{tpu_custom_call.1} parent=1 // pred_check_branch
      %26 = sbr.rel (0) target = $region29
    $region28: #{tpu_custom_call.1} parent=1 // pred_region
      _
    $region29: #{tpu_custom_call.1} parent=1 // pred_fallthru
      _
    %v27 = vld [vmem:[%s0] sm:$0x3]
    %v28 = vld [vmem:[%s1] sm:$0xff]
    %v29 = vld [vmem:[%s2] sm:$0x1]
    %v31 = vlaneseq
    %v32 = vshrl.u32 %v31, 7
    %v33 = vsub.s32 0, %v32
    %v34 = vrot.slane %v29, %v33
    %vm36 = vcmask 64512
    %v38 = vsel %vm36, %v27, 0
    %40 = vmatprep.subr.mxu0 0.0
    %41 = vmatpush1.msra.mxu0 %v28
    %42 = vmatprep.subr.mxu0 0.0
    %43 = vmatpush1.msra.mxu0 0.0
    %44 = vmatprep.subr.mxu0 0.0
    %45 = vmatpush1.msra.mxu0 0.0
    %46 = vmatprep.subr.mxu0 0.0
    %47 = vmatpush1.msra.mxu0 0.0
    %48 = vmatprep.subr.mxu0 0.0
    %49 = vmatpush1.msra.mxu0 0.0
    %50 = vmatprep.subr.mxu0 0.0
    %51 = vmatpush1.msra.mxu0 0.0
    %52 = vmatprep.subr.mxu0 0.0
    %53 = vmatpush1.msra.mxu0 0.0
    %54 = vmatprep.subr.mxu0 0.0
    %55 = vmatpush1.msra.mxu0 0.0
    %56 = vmatprep.subr.mxu0 0.0
    %57 = vmatpush1.msra.mxu0 0.0
    %58 = vmatprep.subr.mxu0 0.0
    %59 = vmatpush1.msra.mxu0 0.0
    %60 = vmatprep.subr.mxu0 0.0
    %61 = vmatpush1.msra.mxu0 0.0
    %62 = vmatprep.subr.mxu0 0.0
    %63 = vmatpush1.msra.mxu0 0.0
    %64 = vmatprep.subr.mxu0 0.0
    %65 = vmatpush1.msra.mxu0 0.0
    %66 = vmatprep.subr.mxu0 0.0
    %67 = vmatpush1.msra.mxu0 0.0
    %68 = vmatprep.subr.mxu0 0.0
    %69 = vmatpush1.msra.mxu0 0.0
    %70 = vmatprep.subr.mxu0 0.0
    %71 = vmatpush1.msra.mxu0 0.0
    %72 = vmatprep.subr.mxu0 0.0
    %73 = vmatpush1.msra.mxu0 0.0
    %74 = vmatprep.subr.mxu0 0.0
    %75 = vmatpush1.msra.mxu0 0.0
    %76 = vmatprep.subr.mxu0 0.0
    %77 = vmatpush1.msra.mxu0 0.0
    %78 = vmatprep.subr.mxu0 0.0
    %79 = vmatpush1.msra.mxu0 0.0
    %80 = vmatprep.subr.mxu0 0.0
    %81 = vmatpush1.msra.mxu0 0.0
    %82 = vmatprep.subr.mxu0 0.0
    %83 = vmatpush1.msra.mxu0 0.0
    %84 = vmatprep.subr.mxu0 0.0
    %85 = vmatpush1.msra.mxu0 0.0
    %86 = vmatprep.subr.mxu0 0.0
    %87 = vmatpush1.msra.mxu0 0.0
    %88 = vmatprep.subr.mxu0 0.0
    %89 = vmatpush1.msra.mxu0 0.0
    %90 = vmatprep.subr.mxu0 0.0
    %91 = vmatpush1.msra.mxu0 0.0
    %92 = vmatprep.subr.mxu0 0.0
    %93 = vmatpush1.msra.mxu0 0.0
    %94 = vmatprep.subr.mxu0 0.0
    %95 = vmatpush1.msra.mxu0 0.0
    %96 = vmatprep.subr.mxu0 0.0
    %97 = vmatpush1.msra.mxu0 0.0
    %98 = vmatprep.subr.mxu0 0.0
    %99 = vmatpush1.msra.mxu0 0.0
    %100 = vmatprep.subr.mxu0 0.0
    %101 = vmatpush1.msra.mxu0 0.0
    %102 = vmatprep.subr.mxu0 0.0
    %103 = vmatpush1.msra.mxu0 0.0
    %104 = vmatprep.mubr.f32.mxu0 0.0
    %105 = vmatmul.mubr.f32.gmra.mrb[0].mxu0 %v38
    %v106 = vpop.f32.mrb[0].mxu0
    %v107 = vadd.f32 %v34, %v106
    %v108 = vpop.f32.mrb[0].mxu0
    %109 = vdwg.mxu0
    %v110 = vmax.f32 %v107, 0.0
    %v111 = vld [vmem:[%s3] sm:$0xff]
    %v112 = vld [vmem:[%s3 + $0x8] sm:$0xff]
    %v113 = vld [vmem:[%s3 + $0x10] sm:$0xff]
    %v114 = vld [vmem:[%s3 + $0x18] sm:$0xff]
    %v115 = vld [vmem:[%s3 + $0x20] sm:$0xff]
    %v116 = vld [vmem:[%s3 + $0x28] sm:$0xff]
    %v117 = vld [vmem:[%s3 + $0x30] sm:$0xff]
    %v118 = vld [vmem:[%s3 + $0x38] sm:$0xff]
    %v119 = vld [vmem:[%s4] sm:$0x1]
    %v121 = vlaneseq
    %v122 = vshrl.u32 %v121, 7
    %v123 = vsub.s32 0, %v122
    %v124 = vrot.slane %v119, %v123
    %vm126 = vcmask 523264
    %v128 = vsel %vm126, %v110, 0
    %130 = vmatprep.subr.mxu0 0.0
    %131 = vmatpush1.msra.mxu0 %v111
    %132 = vmatprep.subr.mxu0 0.0
    %133 = vmatpush1.msra.mxu0 %v112
    %134 = vmatprep.subr.mxu0 0.0
    %135 = vmatpush1.msra.mxu0 %v113
    %136 = vmatprep.subr.mxu0 0.0
    %137 = vmatpush1.msra.mxu0 %v114
    %138 = vmatprep.subr.mxu0 0.0
    %139 = vmatpush1.msra.mxu0 %v115
    %140 = vmatprep.subr.mxu0 0.0
    %141 = vmatpush1.msra.mxu0 %v116
    %142 = vmatprep.subr.mxu0 0.0
    %143 = vmatpush1.msra.mxu0 %v117
    %144 = vmatprep.subr.mxu0 0.0
    %145 = vmatpush1.msra.mxu0 %v118
    %146 = vmatprep.subr.mxu0 0.0
    %147 = vmatpush1.msra.mxu0 0.0
    %148 = vmatprep.subr.mxu0 0.0
    %149 = vmatpush1.msra.mxu0 0.0
    %150 = vmatprep.subr.mxu0 0.0
    %151 = vmatpush1.msra.mxu0 0.0
    %152 = vmatprep.subr.mxu0 0.0
    %153 = vmatpush1.msra.mxu0 0.0
    %154 = vmatprep.subr.mxu0 0.0
    %155 = vmatpush1.msra.mxu0 0.0
    %156 = vmatprep.subr.mxu0 0.0
    %157 = vmatpush1.msra.mxu0 0.0
    %158 = vmatprep.subr.mxu0 0.0
    %159 = vmatpush1.msra.mxu0 0.0
    %160 = vmatprep.subr.mxu0 0.0
    %161 = vmatpush1.msra.mxu0 0.0
    %162 = vmatprep.subr.mxu0 0.0
    %163 = vmatpush1.msra.mxu0 0.0
    %164 = vmatprep.subr.mxu0 0.0
    %165 = vmatpush1.msra.mxu0 0.0
    %166 = vmatprep.subr.mxu0 0.0
    %167 = vmatpush1.msra.mxu0 0.0
    %168 = vmatprep.subr.mxu0 0.0
    %169 = vmatpush1.msra.mxu0 0.0
    %170 = vmatprep.subr.mxu0 0.0
    %171 = vmatpush1.msra.mxu0 0.0
    %172 = vmatprep.subr.mxu0 0.0
    %173 = vmatpush1.msra.mxu0 0.0
    %174 = vmatprep.subr.mxu0 0.0
    %175 = vmatpush1.msra.mxu0 0.0
    %176 = vmatprep.subr.mxu0 0.0
    %177 = vmatpush1.msra.mxu0 0.0
    %178 = vmatprep.subr.mxu0 0.0
    %179 = vmatpush1.msra.mxu0 0.0
    %180 = vmatprep.subr.mxu0 0.0
    %181 = vmatpush1.msra.mxu0 0.0
    %182 = vmatprep.subr.mxu0 0.0
    %183 = vmatpush1.msra.mxu0 0.0
    %184 = vmatprep.subr.mxu0 0.0
    %185 = vmatpush1.msra.mxu0 0.0
    %186 = vmatprep.subr.mxu0 0.0
    %187 = vmatpush1.msra.mxu0 0.0
    %188 = vmatprep.subr.mxu0 0.0
    %189 = vmatpush1.msra.mxu0 0.0
    %190 = vmatprep.subr.mxu0 0.0
    %191 = vmatpush1.msra.mxu0 0.0
    %192 = vmatprep.subr.mxu0 0.0
    %193 = vmatpush1.msra.mxu0 0.0
    %194 = vmatprep.mubr.f32.mxu0 0.0
    %195 = vmatmul.mubr.f32.gmra.mrb[0].mxu0 %v128
    %v196 = vpop.f32.mrb[0].mxu0
    %v197 = vadd.f32 %v124, %v196
    %v198 = vpop.f32.mrb[0].mxu0
    %199 = vdwg.mxu0
    %v200 = vmax.f32 %v197, 0.0
    %v201 = vld [vmem:[%s5] sm:$0xff]
    %v202 = vld [vmem:[%s5 + $0x8] sm:$0xff]
    %v203 = vld [vmem:[%s5 + $0x10] sm:$0xff]
    %v204 = vld [vmem:[%s5 + $0x18] sm:$0xff]
    %v205 = vld [vmem:[%s5 + $0x20] sm:$0xff]
    %v206 = vld [vmem:[%s5 + $0x28] sm:$0xff]
    %v207 = vld [vmem:[%s5 + $0x30] sm:$0xff]
    %v208 = vld [vmem:[%s5 + $0x38] sm:$0xff]
    %v209 = vld [vmem:[%s6] sm:$0x1]
    %v211 = vlaneseq
    %v212 = vshrl.u32 %v211, 7
    %v213 = vsub.s32 0, %v212
    %v214 = vrot.slane %v209, %v213
    %v217 = vsel %vm126, %v200, 0
    %219 = vmatprep.subr.mxu0 0.0
    %220 = vmatpush1.msra.mxu0 %v201
    %221 = vmatprep.subr.mxu0 0.0
    %222 = vmatpush1.msra.mxu0 %v202
    %223 = vmatprep.subr.mxu0 0.0
    %224 = vmatpush1.msra.mxu0 %v203
    %225 = vmatprep.subr.mxu0 0.0
    %226 = vmatpush1.msra.mxu0 %v204
    %227 = vmatprep.subr.mxu0 0.0
    %228 = vmatpush1.msra.mxu0 %v205
    %229 = vmatprep.subr.mxu0 0.0
    %230 = vmatpush1.msra.mxu0 %v206
    %231 = vmatprep.subr.mxu0 0.0
    %232 = vmatpush1.msra.mxu0 %v207
    %233 = vmatprep.subr.mxu0 0.0
    %234 = vmatpush1.msra.mxu0 %v208
    %235 = vmatprep.subr.mxu0 0.0
    %236 = vmatpush1.msra.mxu0 0.0
    %237 = vmatprep.subr.mxu0 0.0
    %238 = vmatpush1.msra.mxu0 0.0
    %239 = vmatprep.subr.mxu0 0.0
    %240 = vmatpush1.msra.mxu0 0.0
    %241 = vmatprep.subr.mxu0 0.0
    %242 = vmatpush1.msra.mxu0 0.0
    %243 = vmatprep.subr.mxu0 0.0
    %244 = vmatpush1.msra.mxu0 0.0
    %245 = vmatprep.subr.mxu0 0.0
    %246 = vmatpush1.msra.mxu0 0.0
    %247 = vmatprep.subr.mxu0 0.0
    %248 = vmatpush1.msra.mxu0 0.0
    %249 = vmatprep.subr.mxu0 0.0
    %250 = vmatpush1.msra.mxu0 0.0
    %251 = vmatprep.subr.mxu0 0.0
    %252 = vmatpush1.msra.mxu0 0.0
    %253 = vmatprep.subr.mxu0 0.0
    %254 = vmatpush1.msra.mxu0 0.0
    %255 = vmatprep.subr.mxu0 0.0
    %256 = vmatpush1.msra.mxu0 0.0
    %257 = vmatprep.subr.mxu0 0.0
    %258 = vmatpush1.msra.mxu0 0.0
    %259 = vmatprep.subr.mxu0 0.0
    %260 = vmatpush1.msra.mxu0 0.0
    %261 = vmatprep.subr.mxu0 0.0
    %262 = vmatpush1.msra.mxu0 0.0
    %263 = vmatprep.subr.mxu0 0.0
    %264 = vmatpush1.msra.mxu0 0.0
    %265 = vmatprep.subr.mxu0 0.0
    %266 = vmatpush1.msra.mxu0 0.0
    %267 = vmatprep.subr.mxu0 0.0
    %268 = vmatpush1.msra.mxu0 0.0
    %269 = vmatprep.subr.mxu0 0.0
    %270 = vmatpush1.msra.mxu0 0.0
    %271 = vmatprep.subr.mxu0 0.0
    %272 = vmatpush1.msra.mxu0 0.0
    %273 = vmatprep.subr.mxu0 0.0
    %274 = vmatpush1.msra.mxu0 0.0
    %275 = vmatprep.subr.mxu0 0.0
    %276 = vmatpush1.msra.mxu0 0.0
    %277 = vmatprep.subr.mxu0 0.0
    %278 = vmatpush1.msra.mxu0 0.0
    %279 = vmatprep.subr.mxu0 0.0
    %280 = vmatpush1.msra.mxu0 0.0
    %281 = vmatprep.subr.mxu0 0.0
    %282 = vmatpush1.msra.mxu0 0.0
    %283 = vmatprep.mubr.f32.mxu0 0.0
    %284 = vmatmul.mubr.f32.gmra.mrb[0].mxu0 %v217
    %v285 = vpop.f32.mrb[0].mxu0
    %v286 = vadd.f32 %v214, %v285
    %v287 = vpop.f32.mrb[0].mxu0
    %288 = vdwg.mxu0
    %vm289 = vcmask 25600
    %v290 = vsel %vm289, %v286, -inf
    %291 = vmax.xlane.f32.xlu0 %v290
    %v292 = vpop.xlane.xlu0 %291
    %v293 = vsub.f32 %v286, %v292
    %v294 = vmul.f32 %v293, 1.442695
    %v295 = vpow.pop %v294
    %v296 = vsel %vm289, %v295, 0.0
    %297 = vadd.xlane.f32.xlu0 %v296
    %v298 = vpop.xlane.xlu0 %297
    %v299 = vrcp.pop %v298
    %v300 = vmul.f32 %v298, %v299
    %v301 = vsub.f32 2.0, %v300
    %v302 = vmul.f32 %v299, %v301
    %v303 = vmul.f32 %v295, %v302
    %304 = vst.msk [vmem:[#allocation2] sm:$0x3] %vm289, %v303
    // Predicated region
    $region30: #{tpu_custom_call.1} parent=1 // pred_check
      _
    $region31: #{tpu_custom_call.1} parent=1 // pred_check_branch
      %306 = sbr.rel (0) target = $region33
    $region32: #{tpu_custom_call.1} parent=1 // pred_region
      %s308 = ssub.s32 32, 32
      %309 = vsyncadd [#allocation3], %s308
      %s311 = sshll.u32 [#allocation2], 4
      %s312 = int_to_ptr.vmem [resolvable:$true] %s311
      %314 = dma.vmem_to_hbm [thread:$0]  %s312, 32, %s7, [#allocation3]
    $region33: #{tpu_custom_call.1} parent=1 // pred_fallthru
      _
    // Predicated region
    $region34: #{tpu_custom_call.1} parent=1 // pred_check
      _
    $region35: #{tpu_custom_call.1} parent=1 // pred_check_branch
      %316 = sbr.rel (0) target = $region37
    $region36: #{tpu_custom_call.1} parent=1 // pred_region
      %317 = dma.done [#allocation3], 32
    $region37: #{tpu_custom_call.1} parent=1 // pred_fallthru
      _
    %318 = vsyncpa [#allocation3], 1

</llo_original>
